<compile_context>
chip_gen: v7x
topology: tpu7x:2x2x1
jax: 0.10.0
libtpu: 0.0.40
codegen_flags: <defaults>
</compile_context>

<pallas_src>
import jax
import jax.numpy as jnp
from jax.experimental import pallas as pl
from jax.experimental.pallas import tpu as pltpu

HIDDEN1 = 64
HIDDEN2 = 32


def mlp_kernel(x_ref, w1_ref, b1_ref, w2_ref, b2_ref, w3_ref, b3_ref, o_ref):
    # x tile: (TM, D). Transpose so the batch dim sits on lanes, cast to bf16
    # for the MXU. Every intermediate below is lane-dense (features x TM).
    xt = x_ref[...].T.astype(jnp.bfloat16)                       # (D, TM) bf16

    # fc1: Linear(D, 64) + ReLU   (Dropout -> identity at inference)
    h1 = jnp.dot(w1_ref[...], xt, preferred_element_type=jnp.float32)
    h1 = jnp.maximum(h1 + b1_ref[...], 0.0)                      # (64, TM) f32

    # fc2: Linear(64, 32) + ReLU
    h2 = jnp.dot(w2_ref[...], h1.astype(jnp.bfloat16),
                 preferred_element_type=jnp.float32)
    h2 = jnp.maximum(h2 + b2_ref[...], 0.0)                      # (32, TM) f32

    # fc3: Linear(32, 1) -> single output row: VPU multiply + sublane
    # reduction instead of an N=1 MXU matmul.
    out = jnp.sum(h2 * w3_ref[...], axis=0, keepdims=True)       # (1, TM) f32
    o_ref[...] = out + b3_ref[...]


def _round_up(n, m):
    return ((n + m - 1) // m) * m


def ann_forward(x, params, *, block_rows=2048):
    """x: (B, input_dim) float32. params: kernel-layout params (prepare_params).

    Returns (B, 1) float32, matching ANNModel.forward in eval mode.
    """
    w1, b1, w2, b2, w3, b3 = params
    B, D = x.shape

    # Preferred tile, then re-balance so the last tile's zero-padding stays
    # small (waste stays ~O(128 rows/tile) instead of O(block_rows)).
    tm_pref = min(_round_up(block_rows, 128), _round_up(B, 128))
    num_tiles = pl.cdiv(B, tm_pref)
    tm = _round_up(pl.cdiv(B, num_tiles), 128)
    b_pad = num_tiles * tm
    if b_pad != B:
        x = jnp.pad(x, ((0, b_pad - B), (0, 0)))

    resident = lambda shape: pl.BlockSpec(shape, lambda i: (0, 0))

    out = pl.pallas_call(
        mlp_kernel,
        out_shape=jax.ShapeDtypeStruct((1, b_pad), jnp.float32),
        grid=(num_tiles,),
        in_specs=[
            pl.BlockSpec((tm, D), lambda i: (i, 0)),        # x: tiled over batch
            resident(w1.shape), resident(b1.shape),         # VMEM-resident weights
            resident(w2.shape), resident(b2.shape),
            resident(w3.shape), resident(b3.shape),
        ],
        out_specs=pl.BlockSpec((1, tm), lambda i: (0, i)),  # lane-dense output row
        compiler_params=pltpu.CompilerParams(
            dimension_semantics=("parallel",),
            vmem_limit_bytes=32 * 1024 * 1024,
        ),
    )(x, w1, b1, w2, b2, w3, b3)

    return out[0, :B].reshape(B, 1)


def init_linear_torch(key, fan_in, fan_out):
    # torch.nn.Linear default init: U(-1/sqrt(fan_in), 1/sqrt(fan_in)),
    # weight shape (out_features, in_features), bias shape (out_features,).
    kw, kb = jax.random.split(key)
    bound = float(1.0 / (fan_in ** 0.5))
    w = jax.random.uniform(kw, (fan_out, fan_in), jnp.float32, -bound, bound)
    b = jax.random.uniform(kb, (fan_out,), jnp.float32, -bound, bound)
    return w, b


def prepare_params(torch_params):
    """torch-layout ((out,in) weights, (out,) biases) -> kernel layout.

    MXU weights go to bf16 (native MXU path, fewer resident bytes); biases and
    the 32-element fc3 weight stay f32 (f32 VPU epilogue, required on v5e).
    """
    (w1, b1), (w2, b2), (w3, b3) = torch_params
    return (
        w1.astype(jnp.bfloat16),                 # (64, D)
        b1.reshape(-1, 1).astype(jnp.float32),   # (64, 1)
        w2.astype(jnp.bfloat16),                 # (32, 64)
        b2.reshape(-1, 1).astype(jnp.float32),   # (32, 1)
        w3.T.astype(jnp.float32),                # (32, 1)
        b3.reshape(1, 1).astype(jnp.float32),    # (1, 1)
    )


def reference_forward(x, torch_params):
    (w1, b1), (w2, b2), (w3, b3) = torch_params
    h1 = jnp.maximum(x @ w1.T + b1, 0.0)
    h2 = jnp.maximum(h1 @ w2.T + b2, 0.0)
    return h2 @ w3.T + b3


if __name__ == "__main__":
    key = jax.random.PRNGKey(0)
    k_x, k1, k2, k3 = jax.random.split(key, 4)

    batch = 8
    input_dim = 16  # stand-in for X_train_scaled.shape[1]

    x = jax.random.normal(k_x, (batch, input_dim), jnp.float32)
    torch_params = (
        init_linear_torch(k1, input_dim, HIDDEN1),
        init_linear_torch(k2, HIDDEN1, HIDDEN2),
        init_linear_torch(k3, HIDDEN2, 1),
    )
    params = prepare_params(torch_params)

    out = jax.block_until_ready(ann_forward(x, params))
    ref = reference_forward(x, torch_params)
    assert out.shape == (batch, 1), out.shape
    # bf16 matmul path vs f32 reference -> loose tolerance
    assert jnp.allclose(out, ref, atol=2e-2, rtol=2e-2), \
        float(jnp.max(jnp.abs(out - ref)))

    # Exercise the multi-tile grid + tail-padding + tile re-balancing path too.
    x2 = jax.random.normal(jax.random.PRNGKey(1), (300, input_dim), jnp.float32)
    out2 = jax.block_until_ready(ann_forward(x2, params, block_rows=128))
    ref2 = reference_forward(x2, torch_params)
    assert out2.shape == (300, 1), out2.shape
    assert jnp.allclose(out2, ref2, atol=2e-2, rtol=2e-2), \
        float(jnp.max(jnp.abs(out2 - ref2)))

    print("KERNEL_OK")
</pallas_src>

<mosaic_0001>
module attributes {stable_mosaic.version = 11 : i64} {
  func.func @mlp_kernel(%arg0: i32, %arg1: memref<128x16xf32, #tpu.memory_space<vmem>>, %arg2: memref<64x16xbf16, #tpu.memory_space<vmem>>, %arg3: memref<64x1xf32, #tpu.memory_space<vmem>>, %arg4: memref<32x64xbf16, #tpu.memory_space<vmem>>, %arg5: memref<32x1xf32, #tpu.memory_space<vmem>>, %arg6: memref<32x1xf32, #tpu.memory_space<vmem>>, %arg7: memref<1x1xf32, #tpu.memory_space<vmem>>, %arg8: memref<1x128xf32, #tpu.memory_space<vmem>>) attributes {dimension_semantics = [#tpu.dimension_semantics<parallel>], iteration_bounds = array<i64: 1>, scalar_prefetch = 0 : i64, scratch_operands = 0 : i64, tpu.core_type = #tpu.core_type<tc>, window_params = [{transform_indices = @transform_0, window_bounds = array<i64: 128, 16>}, {pipeline_mode = #tpu.pipeline_mode<synchronous>, transform_indices = @transform_1, window_bounds = array<i64: 64, 16>}, {pipeline_mode = #tpu.pipeline_mode<synchronous>, transform_indices = @transform_2, window_bounds = array<i64: 64, 1>}, {pipeline_mode = #tpu.pipeline_mode<synchronous>, transform_indices = @transform_3, window_bounds = array<i64: 32, 64>}, {pipeline_mode = #tpu.pipeline_mode<synchronous>, transform_indices = @transform_4, window_bounds = array<i64: 32, 1>}, {pipeline_mode = #tpu.pipeline_mode<synchronous>, transform_indices = @transform_5, window_bounds = array<i64: 32, 1>}, {pipeline_mode = #tpu.pipeline_mode<synchronous>, transform_indices = @transform_6, window_bounds = array<i64: 1, 1>}, {transform_indices = @transform_7, window_bounds = array<i64: 1, 128>}]} {
    %c0 = arith.constant 0 : index
    %c0_0 = arith.constant 0 : index
    %0 = vector.load %arg1[%c0, %c0_0] : memref<128x16xf32, #tpu.memory_space<vmem>>, vector<128x16xf32>
    %1 = tpu.transpose %0, [1, 0] : vector<128x16xf32> -> vector<16x128xf32>
    %2 = arith.truncf %1 : vector<16x128xf32> to vector<16x128xbf16>
    %c0_1 = arith.constant 0 : index
    %c0_2 = arith.constant 0 : index
    %3 = vector.load %arg2[%c0_1, %c0_2] : memref<64x16xbf16, #tpu.memory_space<vmem>>, vector<64x16xbf16>
    %cst = arith.constant dense<0.000000e+00> : vector<64x128xf32>
    %4 = tpu.matmul %3, %2, %cst {dimension_numbers = #tpu.dot_dimension_numbers<[1], [0], [0], [1], [0, 0, 1, 1], [], []>} : vector<64x16xbf16>, vector<16x128xbf16>, vector<64x128xf32> -> vector<64x128xf32>
    %c0_3 = arith.constant 0 : index
    %c0_4 = arith.constant 0 : index
    %5 = vector.load %arg3[%c0_3, %c0_4] : memref<64x1xf32, #tpu.memory_space<vmem>>, vector<64x1xf32>
    %6 = vector.broadcast %5 : vector<64x1xf32> to vector<64x128xf32>
    %7 = arith.addf %4, %6 : vector<64x128xf32>
    %cst_5 = arith.constant 0.000000e+00 : f32
    %8 = vector.broadcast %cst_5 : f32 to vector<64x128xf32>
    %9 = arith.maximumf %7, %8 : vector<64x128xf32>
    %c0_6 = arith.constant 0 : index
    %c0_7 = arith.constant 0 : index
    %10 = vector.load %arg4[%c0_6, %c0_7] : memref<32x64xbf16, #tpu.memory_space<vmem>>, vector<32x64xbf16>
    %11 = arith.truncf %9 : vector<64x128xf32> to vector<64x128xbf16>
    %cst_8 = arith.constant dense<0.000000e+00> : vector<32x128xf32>
    %12 = tpu.matmul %10, %11, %cst_8 {dimension_numbers = #tpu.dot_dimension_numbers<[1], [0], [0], [1], [0, 0, 1, 1], [], []>} : vector<32x64xbf16>, vector<64x128xbf16>, vector<32x128xf32> -> vector<32x128xf32>
    %c0_9 = arith.constant 0 : index
    %c0_10 = arith.constant 0 : index
    %13 = vector.load %arg5[%c0_9, %c0_10] : memref<32x1xf32, #tpu.memory_space<vmem>>, vector<32x1xf32>
    %14 = vector.broadcast %13 : vector<32x1xf32> to vector<32x128xf32>
    %15 = arith.addf %12, %14 : vector<32x128xf32>
    %cst_11 = arith.constant 0.000000e+00 : f32
    %16 = vector.broadcast %cst_11 : f32 to vector<32x128xf32>
    %17 = arith.maximumf %15, %16 : vector<32x128xf32>
    %c0_12 = arith.constant 0 : index
    %c0_13 = arith.constant 0 : index
    %18 = vector.load %arg6[%c0_12, %c0_13] : memref<32x1xf32, #tpu.memory_space<vmem>>, vector<32x1xf32>
    %19 = vector.broadcast %18 : vector<32x1xf32> to vector<32x128xf32>
    %20 = arith.mulf %17, %19 : vector<32x128xf32>
    %cst_14 = arith.constant dense<0.000000e+00> : vector<128xf32>
    %21 = vector.multi_reduction <add>, %20, %cst_14 [0] : vector<32x128xf32> to vector<128xf32>
    %22 = vector.shape_cast %21 : vector<128xf32> to vector<1x128xf32>
    %c0_15 = arith.constant 0 : index
    %c0_16 = arith.constant 0 : index
    %23 = vector.load %arg7[%c0_15, %c0_16] : memref<1x1xf32, #tpu.memory_space<vmem>>, vector<1x1xf32>
    %24 = vector.broadcast %23 : vector<1x1xf32> to vector<1x128xf32>
    %25 = arith.addf %22, %24 : vector<1x128xf32>
    %c0_17 = arith.constant 0 : index
    %c0_18 = arith.constant 0 : index
    %26 = vector.load %arg8[%c0_17, %c0_18] : memref<1x128xf32, #tpu.memory_space<vmem>>, vector<1x128xf32>
    tpu.vector_store %arg8[%c0_17, %c0_18], %25 {strides = array<i32>} : memref<1x128xf32, #tpu.memory_space<vmem>>, vector<1x128xf32>,
    return
  }
  func.func @transform_0(%arg0: i32) -> (i32, i32) {
    %c0_i32 = arith.constant 0 : i32
    %c0_i32_0 = arith.constant 0 : i32
    return %arg0, %c0_i32 : i32, i32
  }
  func.func @transform_1(%arg0: i32) -> (i32, i32) {
    %c0_i32 = arith.constant 0 : i32
    %c0_i32_0 = arith.constant 0 : i32
    %c0_i32_1 = arith.constant 0 : i32
    return %c0_i32, %c0_i32_0 : i32, i32
  }
  func.func @transform_2(%arg0: i32) -> (i32, i32) {
    %c0_i32 = arith.constant 0 : i32
    %c0_i32_0 = arith.constant 0 : i32
    %c0_i32_1 = arith.constant 0 : i32
    return %c0_i32, %c0_i32_0 : i32, i32
  }
  func.func @transform_3(%arg0: i32) -> (i32, i32) {
    %c0_i32 = arith.constant 0 : i32
    %c0_i32_0 = arith.constant 0 : i32
    %c0_i32_1 = arith.constant 0 : i32
    return %c0_i32, %c0_i32_0 : i32, i32
  }
  func.func @transform_4(%arg0: i32) -> (i32, i32) {
    %c0_i32 = arith.constant 0 : i32
    %c0_i32_0 = arith.constant 0 : i32
    %c0_i32_1 = arith.constant 0 : i32
    return %c0_i32, %c0_i32_0 : i32, i32
  }
  func.func @transform_5(%arg0: i32) -> (i32, i32) {
    %c0_i32 = arith.constant 0 : i32
    %c0_i32_0 = arith.constant 0 : i32
    %c0_i32_1 = arith.constant 0 : i32
    return %c0_i32, %c0_i32_0 : i32, i32
  }
  func.func @transform_6(%arg0: i32) -> (i32, i32) {
    %c0_i32 = arith.constant 0 : i32
    %c0_i32_0 = arith.constant 0 : i32
    %c0_i32_1 = arith.constant 0 : i32
    return %c0_i32, %c0_i32_0 : i32, i32
  }
  func.func @transform_7(%arg0: i32) -> (i32, i32) {
    %c0_i32 = arith.constant 0 : i32
    %c0_i32_0 = arith.constant 0 : i32
    return %c0_i32, %arg0 : i32, i32
  }
}

</mosaic_0001>

<llo_original>
// kernel: tpu_custom_call.1
$region0: #{tpu_custom_call.1}
  #allocation0 [shape = 'u32[]', space=smem, size = 0x4, offset = 0x4, fixed_abs, tag = 'smem constant byte address 0x4 - core index']
  #allocation1 [shape = 'u32[144,128]{1,0:T(1,128)}', space=vmem, size = 0x12000, scoped, tag = 'internal scratch']
  #allocation2 [shape = 'f32[1,1]{1,0:T(1,128)S(1)}', space=vmem, size = 0x200, scoped, tag = 'scoped memory for tpu_custom_call.1']
  %s0 = inlined_call_operand.vmem [shape: f32[128,16], index: 0, kind: input, shape index: {}]
  %s1 = inlined_call_operand.vmem [shape: bf16[64,16], index: 1, kind: input, shape index: {}]
  %s2 = inlined_call_operand.vmem [shape: f32[64,1], index: 2, kind: input, shape index: {}]
  %s3 = inlined_call_operand.vmem [shape: bf16[32,64], index: 3, kind: input, shape index: {}]
  %s4 = inlined_call_operand.vmem [shape: f32[32,1], index: 4, kind: input, shape index: {}]
  %s5 = inlined_call_operand.vmem [shape: f32[32,1], index: 5, kind: input, shape index: {}]
  %s6 = inlined_call_operand.<no memory space> [shape: f32[1,1], index: 6, kind: input, shape index: {}]
  %s7 = inlined_call_operand.hbm [shape: f32[1,128], index: 7, kind: output, shape index: {}]
  %s8 = sld [smem:[#allocation0]]
  $region38: #{tpu_custom_call.1} parent=0
    _
  %s10 = ssub.s32 1, %s8
  %s11 = scalar_select 0, %s10, %s8
  %v12 = vstv %s6
  %13 = vst [vmem:[#allocation2] sm:$0x1] %v12
  $region1: #{tpu_custom_call.1} parent=0
    #allocation3 [shape = 'u8[512]{0}', space=vmem, size = 0x400, scoped, tag = 'output window, operand 0, single buffered']
    #allocation4 [shape = 's32[1]{0}', space=sflag, size = 0x4, scoped, tag = 'scoped memory for tpu_custom_call.1']
    %14 = vsyncpa [#allocation4], 0
    // Predicated region
    $region2: #{tpu_custom_call.1} parent=1 // pred_check
      _
    $region3: #{tpu_custom_call.1} parent=1 // pred_check_branch
      %16 = sbr.rel (0) target = $region5
    $region4: #{tpu_custom_call.1} parent=1 // pred_region
      _
    $region5: #{tpu_custom_call.1} parent=1 // pred_fallthru
      _
    // Predicated region
    $region6: #{tpu_custom_call.1} parent=1 // pred_check
      _
    $region7: #{tpu_custom_call.1} parent=1 // pred_check_branch
      %18 = sbr.rel (0) target = $region9
    $region8: #{tpu_custom_call.1} parent=1 // pred_region
      _
    $region9: #{tpu_custom_call.1} parent=1 // pred_fallthru
      _
    // Predicated region
    $region10: #{tpu_custom_call.1} parent=1 // pred_check
      _
    $region11: #{tpu_custom_call.1} parent=1 // pred_check_branch
      %20 = sbr.rel (0) target = $region13
    $region12: #{tpu_custom_call.1} parent=1 // pred_region
      _
    $region13: #{tpu_custom_call.1} parent=1 // pred_fallthru
      _
    // Predicated region
    $region14: #{tpu_custom_call.1} parent=1 // pred_check
      _
    $region15: #{tpu_custom_call.1} parent=1 // pred_check_branch
      %22 = sbr.rel (0) target = $region17
    $region16: #{tpu_custom_call.1} parent=1 // pred_region
      _
    $region17: #{tpu_custom_call.1} parent=1 // pred_fallthru
      _
    // Predicated region
    $region18: #{tpu_custom_call.1} parent=1 // pred_check
      _
    $region19: #{tpu_custom_call.1} parent=1 // pred_check_branch
      %24 = sbr.rel (0) target = $region21
    $region20: #{tpu_custom_call.1} parent=1 // pred_region
      _
    $region21: #{tpu_custom_call.1} parent=1 // pred_fallthru
      _
    // Predicated region
    $region22: #{tpu_custom_call.1} parent=1 // pred_check
      _
    $region23: #{tpu_custom_call.1} parent=1 // pred_check_branch
      %26 = sbr.rel (0) target = $region25
    $region24: #{tpu_custom_call.1} parent=1 // pred_region
      _
    $region25: #{tpu_custom_call.1} parent=1 // pred_fallthru
      _
    // Predicated region
    $region26: #{tpu_custom_call.1} parent=1 // pred_check
      _
    $region27: #{tpu_custom_call.1} parent=1 // pred_check_branch
      %28 = sbr.rel (0) target = $region29
    $region28: #{tpu_custom_call.1} parent=1 // pred_region
      _
    $region29: #{tpu_custom_call.1} parent=1 // pred_fallthru
      _
    %v30 = vld [vmem:[%s0] sm:$0xff]
    %v31 = vld [vmem:[%s0 + $0x8] sm:$0xff]
    %v32 = vld [vmem:[%s0 + $0x10] sm:$0xff]
    %v33 = vld [vmem:[%s0 + $0x18] sm:$0xff]
    %v34 = vld [vmem:[%s0 + $0x20] sm:$0xff]
    %v35 = vld [vmem:[%s0 + $0x28] sm:$0xff]
    %v36 = vld [vmem:[%s0 + $0x30] sm:$0xff]
    %v37 = vld [vmem:[%s0 + $0x38] sm:$0xff]
    %v38 = vld [vmem:[%s0 + $0x40] sm:$0xff]
    %v39 = vld [vmem:[%s0 + $0x48] sm:$0xff]
    %v40 = vld [vmem:[%s0 + $0x50] sm:$0xff]
    %v41 = vld [vmem:[%s0 + $0x58] sm:$0xff]
    %v42 = vld [vmem:[%s0 + $0x60] sm:$0xff]
    %v43 = vld [vmem:[%s0 + $0x68] sm:$0xff]
    %v44 = vld [vmem:[%s0 + $0x70] sm:$0xff]
    %v45 = vld [vmem:[%s0 + $0x78] sm:$0xff]
    %46 = vxpose.xlu0.b32.start [1/16] %v30, 128
    %47 = vxpose.xlu0.b32.cont [2/16] %v31, 128
    %48 = vxpose.xlu0.b32.cont [3/16] %v32, 128
    %49 = vxpose.xlu0.b32.cont [4/16] %v33, 128
    %50 = vxpose.xlu0.b32.cont [5/16] %v34, 128
    %51 = vxpose.xlu0.b32.cont [6/16] %v35, 128
    %52 = vxpose.xlu0.b32.cont [7/16] %v36, 128
    %53 = vxpose.xlu0.b32.cont [8/16] %v37, 128
    %54 = vxpose.xlu0.b32.cont [9/16] %v38, 128
    %55 = vxpose.xlu0.b32.cont [10/16] %v39, 128
    %56 = vxpose.xlu0.b32.cont [11/16] %v40, 128
    %57 = vxpose.xlu0.b32.cont [12/16] %v41, 128
    %58 = vxpose.xlu0.b32.cont [13/16] %v42, 128
    %59 = vxpose.xlu0.b32.cont [14/16] %v43, 128
    %60 = vxpose.xlu0.b32.cont [15/16] %v44, 128
    %61 = vxpose.xlu0.b32.end [16/16] %v45, 128
    %v62 = vpop.trf.xlu0
    %v63 = vpop.trf.xlu0
    %v64 = vpop.trf.xlu0
    %v65 = vpop.trf.xlu0
    %v66 = vpop.trf.xlu0
    %v67 = vpop.trf.xlu0
    %v68 = vpop.trf.xlu0
    %v69 = vpop.trf.xlu0
    %v70 = vpop.trf.xlu0
    %v71 = vpop.trf.xlu0
    %v72 = vpop.trf.xlu0
    %v73 = vpop.trf.xlu0
    %v74 = vpop.trf.xlu0
    %v75 = vpop.trf.xlu0
    %v76 = vpop.trf.xlu0
    %v77 = vpop.trf.xlu0
    %v78 = vpack.c.bf16 %v63, %v62
    %v79 = vld [vmem:[%s1] sm:$0xf]
    %v80 = vld [vmem:[%s1 + $0x4] sm:$0xf]
    %v81 = vld [vmem:[%s1 + $0x8] sm:$0xf]
    %v82 = vld [vmem:[%s1 + $0xc] sm:$0xf]
    %v83 = vld [vmem:[%s1 + $0x10] sm:$0xf]
    %v84 = vld [vmem:[%s1 + $0x14] sm:$0xf]
    %v85 = vld [vmem:[%s1 + $0x18] sm:$0xf]
    %v86 = vld [vmem:[%s1 + $0x1c] sm:$0xf]
    %v87 = vld [vmem:[%s2] sm:$0xff]
    %v88 = vld [vmem:[%s2 + $0x8] sm:$0xff]
    %v89 = vld [vmem:[%s2 + $0x10] sm:$0xff]
    %v90 = vld [vmem:[%s2 + $0x18] sm:$0xff]
    %v91 = vld [vmem:[%s2 + $0x20] sm:$0xff]
    %v92 = vld [vmem:[%s2 + $0x28] sm:$0xff]
    %v93 = vld [vmem:[%s2 + $0x30] sm:$0xff]
    %v94 = vld [vmem:[%s2 + $0x38] sm:$0xff]
    %96 = vset.pattern.permute.xlu0 0
    %97 = vperm.xlu0 %96, %v87
    %v98 = vpop.permute.xlu0 %97
    %101 = vset.pattern.permute.xlu0 0
    %102 = vperm.xlu0 %101, %v88
    %v103 = vpop.permute.xlu0 %102
    %106 = vset.pattern.permute.xlu0 0
    %107 = vperm.xlu0 %106, %v89
    %v108 = vpop.permute.xlu0 %107
    %111 = vset.pattern.permute.xlu0 0
    %112 = vperm.xlu0 %111, %v90
    %v113 = vpop.permute.xlu0 %112
    %116 = vset.pattern.permute.xlu0 0
    %117 = vperm.xlu0 %116, %v91
    %v118 = vpop.permute.xlu0 %117
    %121 = vset.pattern.permute.xlu0 0
    %122 = vperm.xlu0 %121, %v92
    %v123 = vpop.permute.xlu0 %122
    %126 = vset.pattern.permute.xlu0 0
    %127 = vperm.xlu0 %126, %v93
    %v128 = vpop.permute.xlu0 %127
    %131 = vset.pattern.permute.xlu0 0
    %132 = vperm.xlu0 %131, %v94
    %v133 = vpop.permute.xlu0 %132
    %v143 = vunpack.c.l.b16 %v79
    %v144 = vunpack.c.l.b16 %v80
    %v145 = vunpack.c.l.b16 %v81
    %v146 = vunpack.c.l.b16 %v82
    %v147 = vunpack.c.l.b16 %v83
    %v148 = vunpack.c.l.b16 %v84
    %v149 = vunpack.c.l.b16 %v85
    %v150 = vunpack.c.l.b16 %v86
    %v151 = vpack.c.b16 %v144, %v143
    %v152 = vpack.c.b16 %v146, %v145
    %v153 = vpack.c.b16 %v148, %v147
    %v154 = vpack.c.b16 %v150, %v149
    %vm155 = vcmask 130048
    %v157 = vsel %vm155, %v151, 0
    %v160 = vsel %vm155, %v152, 0
    %v163 = vsel %vm155, %v153, 0
    %v166 = vsel %vm155, %v154, 0
    %168 = vmatprep.subr.bf16.mxu0 0
    %169 = vmatpush1.bf16.msra.mxu0 %v78
    %170 = vmatprep.subr.bf16.mxu0 0
    %171 = vmatpush1.bf16.msra.mxu0 0
    %172 = vmatprep.subr.bf16.mxu0 0
    %173 = vmatpush1.bf16.msra.mxu0 0
    %174 = vmatprep.subr.bf16.mxu0 0
    %175 = vmatpush1.bf16.msra.mxu0 0
    %176 = vmatprep.subr.bf16.mxu0 0
    %177 = vmatpush1.bf16.msra.mxu0 0
    %178 = vmatprep.subr.bf16.mxu0 0
    %179 = vmatpush1.bf16.msra.mxu0 0
    %180 = vmatprep.subr.bf16.mxu0 0
    %181 = vmatpush1.bf16.msra.mxu0 0
    %182 = vmatprep.subr.bf16.mxu0 0
    %183 = vmatpush1.bf16.msra.mxu0 0
    %184 = vmatprep.subr.bf16.mxu0 0
    %185 = vmatpush1.bf16.msra.mxu0 0
    %186 = vmatprep.subr.bf16.mxu0 0
    %187 = vmatpush1.bf16.msra.mxu0 0
    %188 = vmatprep.subr.bf16.mxu0 0
    %189 = vmatpush1.bf16.msra.mxu0 0
    %190 = vmatprep.subr.bf16.mxu0 0
    %191 = vmatpush1.bf16.msra.mxu0 0
    %192 = vmatprep.subr.bf16.mxu0 0
    %193 = vmatpush1.bf16.msra.mxu0 0
    %194 = vmatprep.subr.bf16.mxu0 0
    %195 = vmatpush1.bf16.msra.mxu0 0
    %196 = vmatprep.subr.bf16.mxu0 0
    %197 = vmatpush1.bf16.msra.mxu0 0
    %198 = vmatprep.subr.bf16.mxu0 0
    %199 = vmatpush1.bf16.msra.mxu0 0
    %200 = vmatprep.mubr.bf16.mxu0 0
    %201 = vmatmul.mubr.bf16.gmra.mrb[0].mxu0 %v157
    %v202 = vpop.f32.mrb[0].mxu0
    %v203 = vadd.f32 %v98, %v202
    %v204 = vpop.f32.mrb[0].mxu0
    %v205 = vpop.f32.mrb[0].mxu0
    %v206 = vadd.f32 %v103, %v205
    %v207 = vpop.f32.mrb[0].mxu0
    %208 = vmatprep.mubr.bf16.mxu0 0
    %209 = vmatmul.mubr.bf16.gmra.mrb[0].mxu0 %v160
    %v210 = vpop.f32.mrb[0].mxu0
    %v211 = vadd.f32 %v108, %v210
    %v212 = vpop.f32.mrb[0].mxu0
    %v213 = vpop.f32.mrb[0].mxu0
    %v214 = vadd.f32 %v113, %v213
    %v215 = vpop.f32.mrb[0].mxu0
    %216 = vmatprep.mubr.bf16.mxu0 0
    %217 = vmatmul.mubr.bf16.gmra.mrb[0].mxu0 %v163
    %v218 = vpop.f32.mrb[0].mxu0
    %v219 = vadd.f32 %v118, %v218
    %v220 = vpop.f32.mrb[0].mxu0
    %v221 = vpop.f32.mrb[0].mxu0
    %v222 = vadd.f32 %v123, %v221
    %v223 = vpop.f32.mrb[0].mxu0
    %224 = vmatprep.mubr.bf16.mxu0 0
    %225 = vmatmul.mubr.bf16.gmra.mrb[0].mxu0 %v166
    %v226 = vpop.f32.mrb[0].mxu0
    %v227 = vadd.f32 %v128, %v226
    %v228 = vpop.f32.mrb[0].mxu0
    %v229 = vpop.f32.mrb[0].mxu0
    %v230 = vadd.f32 %v133, %v229
    %v231 = vpop.f32.mrb[0].mxu0
    %232 = vdwg.mxu0
    %v233 = vmax.f32 %v203, 0.0
    %v234 = vmax.f32 %v206, 0.0
    %v235 = vmax.f32 %v211, 0.0
    %v236 = vmax.f32 %v214, 0.0
    %v237 = vmax.f32 %v219, 0.0
    %v238 = vmax.f32 %v222, 0.0
    %v239 = vmax.f32 %v227, 0.0
    %v240 = vmax.f32 %v230, 0.0
    %v241 = vld [vmem:[%s3] sm:$0xf]
    %v242 = vld [vmem:[%s3 + $0x4] sm:$0xf]
    %v243 = vld [vmem:[%s3 + $0x8] sm:$0xf]
    %v244 = vld [vmem:[%s3 + $0xc] sm:$0xf]
    %v245 = vpack.c.bf16 %v234, %v233
    %v246 = vpack.c.bf16 %v236, %v235
    %v247 = vpack.c.bf16 %v238, %v237
    %v248 = vpack.c.bf16 %v240, %v239
    %v249 = vld [vmem:[%s4] sm:$0xff]
    %v250 = vld [vmem:[%s4 + $0x8] sm:$0xff]
    %v251 = vld [vmem:[%s4 + $0x10] sm:$0xff]
    %v252 = vld [vmem:[%s4 + $0x18] sm:$0xff]
    %254 = vset.pattern.permute.xlu0 0
    %255 = vperm.xlu0 %254, %v249
    %v256 = vpop.permute.xlu0 %255
    %259 = vset.pattern.permute.xlu0 0
    %260 = vperm.xlu0 %259, %v250
    %v261 = vpop.permute.xlu0 %260
    %264 = vset.pattern.permute.xlu0 0
    %265 = vperm.xlu0 %264, %v251
    %v266 = vpop.permute.xlu0 %265
    %269 = vset.pattern.permute.xlu0 0
    %270 = vperm.xlu0 %269, %v252
    %v271 = vpop.permute.xlu0 %270
    %v277 = vunpack.c.l.b16 %v241
    %v278 = vunpack.c.l.b16 %v242
    %v279 = vunpack.c.l.b16 %v243
    %v280 = vunpack.c.l.b16 %v244
    %v281 = vpack.c.b16 %v278, %v277
    %v282 = vpack.c.b16 %v280, %v279
    %vm283 = vcmask 523264
    %v285 = vsel %vm283, %v281, 0
    %v288 = vsel %vm283, %v282, 0
    %290 = vmatprep.subr.bf16.mxu0 0
    %291 = vmatpush1.bf16.msra.mxu0 %v245
    %292 = vmatprep.subr.bf16.mxu0 0
    %293 = vmatpush1.bf16.msra.mxu0 %v246
    %294 = vmatprep.subr.bf16.mxu0 0
    %295 = vmatpush1.bf16.msra.mxu0 %v247
    %296 = vmatprep.subr.bf16.mxu0 0
    %297 = vmatpush1.bf16.msra.mxu0 %v248
    %298 = vmatprep.subr.bf16.mxu0 0
    %299 = vmatpush1.bf16.msra.mxu0 0
    %300 = vmatprep.subr.bf16.mxu0 0
    %301 = vmatpush1.bf16.msra.mxu0 0
    %302 = vmatprep.subr.bf16.mxu0 0
    %303 = vmatpush1.bf16.msra.mxu0 0
    %304 = vmatprep.subr.bf16.mxu0 0
    %305 = vmatpush1.bf16.msra.mxu0 0
    %306 = vmatprep.subr.bf16.mxu0 0
    %307 = vmatpush1.bf16.msra.mxu0 0
    %308 = vmatprep.subr.bf16.mxu0 0
    %309 = vmatpush1.bf16.msra.mxu0 0
    %310 = vmatprep.subr.bf16.mxu0 0
    %311 = vmatpush1.bf16.msra.mxu0 0
    %312 = vmatprep.subr.bf16.mxu0 0
    %313 = vmatpush1.bf16.msra.mxu0 0
    %314 = vmatprep.subr.bf16.mxu0 0
    %315 = vmatpush1.bf16.msra.mxu0 0
    %316 = vmatprep.subr.bf16.mxu0 0
    %317 = vmatpush1.bf16.msra.mxu0 0
    %318 = vmatprep.subr.bf16.mxu0 0
    %319 = vmatpush1.bf16.msra.mxu0 0
    %320 = vmatprep.subr.bf16.mxu0 0
    %321 = vmatpush1.bf16.msra.mxu0 0
    %322 = vmatprep.mubr.bf16.mxu0 0
    %323 = vmatmul.mubr.bf16.gmra.mrb[0].mxu0 %v285
    %v324 = vpop.f32.mrb[0].mxu0
    %v325 = vadd.f32 %v256, %v324
    %v326 = vpop.f32.mrb[0].mxu0
    %v327 = vpop.f32.mrb[0].mxu0
    %v328 = vadd.f32 %v261, %v327
    %v329 = vpop.f32.mrb[0].mxu0
    %330 = vmatprep.mubr.bf16.mxu0 0
    %331 = vmatmul.mubr.bf16.gmra.mrb[0].mxu0 %v288
    %v332 = vpop.f32.mrb[0].mxu0
    %v333 = vadd.f32 %v266, %v332
    %v334 = vpop.f32.mrb[0].mxu0
    %v335 = vpop.f32.mrb[0].mxu0
    %v336 = vadd.f32 %v271, %v335
    %v337 = vpop.f32.mrb[0].mxu0
    %338 = vdwg.mxu0
    %v339 = vmax.f32 %v325, 0.0
    %v340 = vmax.f32 %v328, 0.0
    %v341 = vmax.f32 %v333, 0.0
    %v342 = vmax.f32 %v336, 0.0
    %v343 = vld [vmem:[%s5] sm:$0xff]
    %v344 = vld [vmem:[%s5 + $0x8] sm:$0xff]
    %v345 = vld [vmem:[%s5 + $0x10] sm:$0xff]
    %v346 = vld [vmem:[%s5 + $0x18] sm:$0xff]
    %348 = vset.pattern.permute.xlu0 0
    %349 = vperm.xlu0 %348, %v343
    %v350 = vpop.permute.xlu0 %349
    %353 = vset.pattern.permute.xlu0 0
    %354 = vperm.xlu0 %353, %v344
    %v355 = vpop.permute.xlu0 %354
    %358 = vset.pattern.permute.xlu0 0
    %359 = vperm.xlu0 %358, %v345
    %v360 = vpop.permute.xlu0 %359
    %363 = vset.pattern.permute.xlu0 0
    %364 = vperm.xlu0 %363, %v346
    %v365 = vpop.permute.xlu0 %364
    %v367 = vmul.f32 %v339, %v350
    %v368 = vmul.f32 %v340, %v355
    %v369 = vmul.f32 %v341, %v360
    %v370 = vmul.f32 %v342, %v365
    %v371 = vadd.f32 %v367, %v368
    %v372 = vadd.f32 %v371, %v369
    %v373 = vadd.f32 %v372, %v370
    %v374 = vrot.slane %v373, 4
    %v375 = vadd.f32 %v373, %v374
    %v376 = vrot.slane %v375, 2
    %v377 = vadd.f32 %v375, %v376
    %v378 = vrot.slane %v377, 1
    %v379 = vadd.f32 %v377, %v378
    %v380 = vld [vmem:[#allocation2] sm:$0x1]
    %382 = vset.pattern.permute.xlu0 0
    %383 = vperm.xlu0 %382, %v380
    %v384 = vpop.permute.xlu0 %383
    %v386 = vlaneseq
    %v387 = vshrl.u32 %v386, 7
    %v388 = vsub.s32 0, %v387
    %v389 = vrot.slane %v384, %v388
    %v390 = vadd.f32 %v379, %v389
    %391 = vst [vmem:[#allocation3] sm:$0x1] %v390
    // Predicated region
    $region30: #{tpu_custom_call.1} parent=1 // pred_check
      _
    $region31: #{tpu_custom_call.1} parent=1 // pred_check_branch
      %393 = sbr.rel (0) target = $region33
    $region32: #{tpu_custom_call.1} parent=1 // pred_region
      %s395 = ssub.s32 16, 16
      %396 = vsyncadd [#allocation4], %s395
      %s398 = sshll.u32 [#allocation3], 4
      %s399 = int_to_ptr.vmem [resolvable:$true] %s398
      %401 = dma.vmem_to_hbm [thread:$0]  %s399, 16, %s7, [#allocation4]
    $region33: #{tpu_custom_call.1} parent=1 // pred_fallthru
      _
    // Predicated region
    $region34: #{tpu_custom_call.1} parent=1 // pred_check
      _
    $region35: #{tpu_custom_call.1} parent=1 // pred_check_branch
      %403 = sbr.rel (0) target = $region37
    $region36: #{tpu_custom_call.1} parent=1 // pred_region
      %404 = dma.done [#allocation4], 16
    $region37: #{tpu_custom_call.1} parent=1 // pred_fallthru
      _
    %405 = vsyncpa [#allocation4], 1

</llo_original>
